<compile_context>
chip_gen: v5e
topology: v5e:2x2
jax: 0.10.0
libtpu: 0.0.40
codegen_flags: <defaults>
</compile_context>

<pallas_src>
import functools

import numpy as np

import jax
import jax.numpy as jnp
from jax.experimental import pallas as pl
from jax.experimental.pallas import tpu as pltpu


# Cap on TILE_NC * W (lane width of one block).  Keeps the block-diagonal
# column matrix (TILE_NC*W x TILE_NC*Wo f32, k copies for MAX) to a few MiB
# and its extra MXU flops far below the HBM roofline, while still giving
# lane-dense (>=128-lane) blocks at realistic channel counts.
_MAX_LANE_WIDTH = 1024

# Explicit scoped-VMEM limit: > v5e's 16 MiB default, < v7x's 64 MiB physical.
_VMEM_LIMIT_BYTES = 48 * 1024 * 1024


def _choose_tile_nc(nc, w):
    """Largest divisor of nc with capped lane width and >= 2 grid steps.

    v7x has 2 TensorCores; a 'parallel' grid axis of extent >= 2 is the only
    way this kernel shards across them, so we never collapse everything into
    a single grid step when nc >= 2.
    """
    best = 1
    for t in range(1, nc + 1):
        if nc % t:
            continue
        if t > 1 and t * w > _MAX_LANE_WIDTH:
            continue
        if nc >= 2 and nc // t < 2:
            continue
        best = t
    return best


def _col_selection_matrices(w, wo, k, s, p, tile_nc, kind):
    """Column-direction (lane axis) pooling matrices, block-diagonal over the
    TILE_NC channels folded onto lanes.

    Per-channel tap j is a one-hot (W, Wo) matrix selecting source column
    clamp(ow*s + j - p, 0, W-1); the clamp fuses the replication padding, so
    no padded tensor is ever built.  For AVERAGE the k taps collapse into a
    single banded count matrix (pool + stride + pad == one matmul).
    """
    w_ids = np.arange(w)[:, None]                       # (W, 1)
    ow_ids = np.arange(wo)[None, :]                     # (1, Wo)
    taps = []
    for j in range(k):
        src = np.clip(ow_ids * s + j - p, 0, w - 1)     # (1, Wo)
        taps.append((w_ids == src).astype(np.float32))  # (W, Wo)
    if kind == 'AVERAGE':
        taps = [np.sum(np.stack(taps), axis=0)]         # banded counts
    eye = np.eye(tile_nc, dtype=np.float32)
    mats = np.stack([np.kron(eye, t) for t in taps])    # (kc, T*W, T*Wo)
    return jnp.asarray(mats)


def _pool_kernel(x_ref, cmat_ref, o_ref, *, kind, k, s, p, h_in, h_out,
                 inv_area):
    # One block = TILE_NC channels folded onto the lane axis: (H, TILE_NC*W).
    # TODO(synk): on v6e/v7x, bf16 inputs could stay bf16 into the MXU; the
    # f32 cast is kept for v5e-safe numerics.
    x = x_ref[0].astype(jnp.float32)

    # Row-direction selection matrices, generated in-kernel from iota (no
    # extra inputs / DMAs).  Tap i maps output row oh -> source row
    # clamp(oh*s + i - p, 0, H-1); the clamp fuses the replication padding.
    oh_ids = jax.lax.broadcasted_iota(jnp.int32, (h_out, h_in), 0)
    h_ids = jax.lax.broadcasted_iota(jnp.int32, (h_out, h_in), 1)

    def row_tap(i):
        src = jnp.clip(oh_ids * s + i - p, 0, h_in - 1)
        return (h_ids == src).astype(jnp.float32)       # (Ho, H) one-hot rows

    # precision=HIGHEST -> the one-hot "gather" matmuls are bit-exact and the
    # banded AVERAGE accumulation runs at full f32 precision on the MXU.
    dot = functools.partial(jnp.dot,
                            precision=jax.lax.Precision.HIGHEST,
                            preferred_element_type=jnp.float32)

    if kind == 'AVERAGE':
        # Pool + stride + padding == two banded MXU matmuls, batched across
        # the whole channel tile; no VPU/XLU slice loops remain.
        r_sum = row_tap(0)
        for i in range(1, k):
            r_sum = r_sum + row_tap(i)
        t = dot(r_sum, x)                               # (Ho, TILE_NC*W)
        out = dot(t, cmat_ref[0]) * inv_area            # (Ho, TILE_NC*Wo)
    else:  # MAX
        # Exact one-hot gathers on the MXU; element-wise max on the VPU.
        # No lane shifts at all, so the 2-XLU budget on v6e/v7x is untouched.
        t = dot(row_tap(0), x)
        for i in range(1, k):
            t = jnp.maximum(t, dot(row_tap(i), x))
        out = dot(t, cmat_ref[0])
        for j in range(1, k):
            out = jnp.maximum(out, dot(t, cmat_ref[j]))

    o_ref[0] = out.astype(o_ref.dtype)


@functools.partial(jax.jit,
                   static_argnames=("kind", "kernel_size", "stride", "padding"))
def pooling_layer(x, *, kind, kernel_size, stride, padding):
    """Pallas equivalent of ReplicationPad2d(padding) + {Avg,Max}Pool2d(k, s).

    x: (N, C, H, W) NCHW, like PyTorch.
    """
    assert kind in ('MAX', 'AVERAGE')
    n, c, h, w = x.shape
    k, s, p = kernel_size, stride, padding
    hp, wp = h + 2 * p, w + 2 * p
    ho = (hp - k) // s + 1
    wo = (wp - k) // s + 1
    nc = n * c

    tile_nc = _choose_tile_nc(nc, w)
    nt = nc // tile_nc
    lw, lwo = tile_nc * w, tile_nc * wo

    # Lane-dense layout (review): fold a TILE_NC-channel group onto the lane
    # axis -> blocks (H, TILE_NC*W) in, (Ho, TILE_NC*Wo) out.  This is
    # wrapper-side layout plumbing; callers holding channels-last data can
    # skip the transpose entirely.
    xt = x.reshape(nt, tile_nc, h, w).transpose(0, 2, 1, 3).reshape(nt, h, lw)

    cmats = _col_selection_matrices(w, wo, k, s, p, tile_nc, kind)

    kernel = functools.partial(_pool_kernel, kind=kind, k=k, s=s, p=p,
                               h_in=h, h_out=ho, inv_area=1.0 / float(k * k))

    out = pl.pallas_call(
        kernel,
        out_shape=jax.ShapeDtypeStruct((nt, ho, lwo), x.dtype),
        grid_spec=pltpu.PrefetchScalarGridSpec(
            num_scalar_prefetch=0,
            grid=(nt,),
            in_specs=[
                # One channel tile of the (unpadded) input per grid step.
                pl.BlockSpec((1, h, lw), lambda i: (i, 0, 0)),
                # Column matrices: constant index_map -> DMA'd once and kept
                # resident in VMEM across the whole grid.
                pl.BlockSpec(cmats.shape, lambda i: (0, 0, 0)),
            ],
            out_specs=pl.BlockSpec((1, ho, lwo), lambda i: (i, 0, 0)),
        ),
        compiler_params=pltpu.CompilerParams(
            dimension_semantics=("parallel",),
            vmem_limit_bytes=_VMEM_LIMIT_BYTES,
        ),
    )(xt, cmats)

    # Undo the lane folding (free reshapes + one small output transpose).
    return (out.reshape(nt, ho, tile_nc, wo)
               .transpose(0, 2, 1, 3)
               .reshape(n, c, ho, wo))


def _ref_pool(x, kind, k, s, p):
    """Pure-JAX reference matching PyTorch ReplicationPad2d + {Avg,Max}Pool2d."""
    xp = jnp.pad(x, ((0, 0), (0, 0), (p, p), (p, p)), mode='edge')
    if kind == 'MAX':
        return jax.lax.reduce_window(xp, -jnp.inf, jax.lax.max,
                                     (1, 1, k, k), (1, 1, s, s), 'VALID')
    summed = jax.lax.reduce_window(xp, 0.0, jax.lax.add,
                                   (1, 1, k, k), (1, 1, s, s), 'VALID')
    return summed / float(k * k)


if __name__ == "__main__":
    key = jax.random.PRNGKey(0)
    x = jax.random.normal(key, (2, 4, 16, 16), dtype=jnp.float32)

    configs = [
        dict(kernel_size=2, stride=2, padding=1),   # original config -> (2,4,9,9)
        dict(kernel_size=3, stride=1, padding=1),   # exercises overlapping windows
    ]
    for cfg in configs:
        for kind in ("MAX", "AVERAGE"):
            out = pooling_layer(x, kind=kind, **cfg)
            out = jax.block_until_ready(out)
            ref = _ref_pool(x, kind, cfg["kernel_size"], cfg["stride"],
                            cfg["padding"])
            assert out.shape == ref.shape, (kind, cfg, out.shape, ref.shape)
            assert jnp.allclose(out, ref, atol=1e-5, rtol=1e-5), (kind, cfg)

    out = pooling_layer(x, kind="MAX", kernel_size=2, stride=2, padding=1)
    assert out.shape == (2, 4, 9, 9), out.shape

    print("KERNEL_OK")
</pallas_src>

<mosaic_0001>
module attributes {stable_mosaic.version = 11 : i64} {
  func.func @_pool_kernel(%arg0: i32, %arg1: memref<1x16x64xf32, #tpu.memory_space<vmem>>, %arg2: memref<2x64x36xf32, #tpu.memory_space<vmem>>, %arg3: memref<1x9x36xf32, #tpu.memory_space<vmem>>) attributes {dimension_semantics = [#tpu.dimension_semantics<parallel>], iteration_bounds = array<i64: 2>, scalar_prefetch = 0 : i64, scratch_operands = 0 : i64, tpu.core_type = #tpu.core_type<tc>, window_params = [{transform_indices = @transform_0, window_bounds = array<i64: 1, 16, 64>}, {pipeline_mode = #tpu.pipeline_mode<synchronous>, transform_indices = @transform_1, window_bounds = array<i64: 2, 64, 36>}, {transform_indices = @transform_2, window_bounds = array<i64: 1, 9, 36>}]} {
    %c0 = arith.constant 0 : index
    %c0_0 = arith.constant 0 : index
    %c0_1 = arith.constant 0 : index
    %0 = vector.load %arg1[%c0, %c0_0, %c0_1] : memref<1x16x64xf32, #tpu.memory_space<vmem>>, vector<1x16x64xf32>
    %1 = vector.shape_cast %0 : vector<1x16x64xf32> to vector<16x64xf32>
    %2 = tpu.iota {dimensions = array<i32: 0>} : vector<9x16xi32>
    %3 = tpu.iota {dimensions = array<i32: 1>} : vector<9x16xi32>
    %c2_i32 = arith.constant 2 : i32
    %4 = vector.broadcast %c2_i32 : i32 to vector<9x16xi32>
    %5 = arith.muli %2, %4 : vector<9x16xi32>
    %c0_i32 = arith.constant 0 : i32
    %6 = vector.broadcast %c0_i32 : i32 to vector<9x16xi32>
    %7 = arith.addi %5, %6 : vector<9x16xi32>
    %c1_i32 = arith.constant 1 : i32
    %8 = vector.broadcast %c1_i32 : i32 to vector<9x16xi32>
    %9 = arith.subi %7, %8 : vector<9x16xi32>
    %c0_i32_2 = arith.constant 0 : i32
    %c15_i32 = arith.constant 15 : i32
    %10 = vector.broadcast %c0_i32_2 : i32 to vector<9x16xi32>
    %11 = arith.maxsi %10, %9 : vector<9x16xi32>
    %12 = vector.broadcast %c15_i32 : i32 to vector<9x16xi32>
    %13 = arith.minsi %12, %11 : vector<9x16xi32>
    %14 = arith.cmpi eq, %3, %13 : vector<9x16xi32>
    %15 = arith.extui %14 : vector<9x16xi1> to vector<9x16xi32>
    %16 = arith.sitofp %15 : vector<9x16xi32> to vector<9x16xf32>
    %cst = arith.constant dense<0.000000e+00> : vector<9x64xf32>
    %17 = tpu.matmul %16, %1, %cst {dimension_numbers = #tpu.dot_dimension_numbers<[1], [0], [0], [1], [0, 0, 1, 1], [], []>, precision = #tpu.contract_precision<fp32>} : vector<9x16xf32>, vector<16x64xf32>, vector<9x64xf32> -> vector<9x64xf32>
    %c2_i32_3 = arith.constant 2 : i32
    %18 = vector.broadcast %c2_i32_3 : i32 to vector<9x16xi32>
    %19 = arith.muli %2, %18 : vector<9x16xi32>
    %c1_i32_4 = arith.constant 1 : i32
    %20 = vector.broadcast %c1_i32_4 : i32 to vector<9x16xi32>
    %21 = arith.addi %19, %20 : vector<9x16xi32>
    %c1_i32_5 = arith.constant 1 : i32
    %22 = vector.broadcast %c1_i32_5 : i32 to vector<9x16xi32>
    %23 = arith.subi %21, %22 : vector<9x16xi32>
    %c0_i32_6 = arith.constant 0 : i32
    %c15_i32_7 = arith.constant 15 : i32
    %24 = vector.broadcast %c0_i32_6 : i32 to vector<9x16xi32>
    %25 = arith.maxsi %24, %23 : vector<9x16xi32>
    %26 = vector.broadcast %c15_i32_7 : i32 to vector<9x16xi32>
    %27 = arith.minsi %26, %25 : vector<9x16xi32>
    %28 = arith.cmpi eq, %3, %27 : vector<9x16xi32>
    %29 = arith.extui %28 : vector<9x16xi1> to vector<9x16xi32>
    %30 = arith.sitofp %29 : vector<9x16xi32> to vector<9x16xf32>
    %cst_8 = arith.constant dense<0.000000e+00> : vector<9x64xf32>
    %31 = tpu.matmul %30, %1, %cst_8 {dimension_numbers = #tpu.dot_dimension_numbers<[1], [0], [0], [1], [0, 0, 1, 1], [], []>, precision = #tpu.contract_precision<fp32>} : vector<9x16xf32>, vector<16x64xf32>, vector<9x64xf32> -> vector<9x64xf32>
    %32 = arith.maximumf %17, %31 : vector<9x64xf32>
    %c0_9 = arith.constant 0 : index
    %c0_10 = arith.constant 0 : index
    %c0_11 = arith.constant 0 : index
    %33 = vector.load %arg2[%c0_9, %c0_10, %c0_11] : memref<2x64x36xf32, #tpu.memory_space<vmem>>, vector<1x64x36xf32>
    %34 = vector.shape_cast %33 : vector<1x64x36xf32> to vector<64x36xf32>
    %cst_12 = arith.constant dense<0.000000e+00> : vector<9x36xf32>
    %35 = tpu.matmul %32, %34, %cst_12 {dimension_numbers = #tpu.dot_dimension_numbers<[1], [0], [0], [1], [0, 0, 1, 1], [], []>, precision = #tpu.contract_precision<fp32>} : vector<9x64xf32>, vector<64x36xf32>, vector<9x36xf32> -> vector<9x36xf32>
    %c1 = arith.constant 1 : index
    %c0_13 = arith.constant 0 : index
    %c0_14 = arith.constant 0 : index
    %36 = vector.load %arg2[%c1, %c0_13, %c0_14] : memref<2x64x36xf32, #tpu.memory_space<vmem>>, vector<1x64x36xf32>
    %37 = vector.shape_cast %36 : vector<1x64x36xf32> to vector<64x36xf32>
    %cst_15 = arith.constant dense<0.000000e+00> : vector<9x36xf32>
    %38 = tpu.matmul %32, %37, %cst_15 {dimension_numbers = #tpu.dot_dimension_numbers<[1], [0], [0], [1], [0, 0, 1, 1], [], []>, precision = #tpu.contract_precision<fp32>} : vector<9x64xf32>, vector<64x36xf32>, vector<9x36xf32> -> vector<9x36xf32>
    %39 = arith.maximumf %35, %38 : vector<9x36xf32>
    %c0_16 = arith.constant 0 : index
    %c0_17 = arith.constant 0 : index
    %c0_18 = arith.constant 0 : index
    %40 = vector.load %arg3[%c0_16, %c0_17, %c0_18] : memref<1x9x36xf32, #tpu.memory_space<vmem>>, vector<1x9x36xf32>
    %41 = vector.shape_cast %40 : vector<1x9x36xf32> to vector<9x36xf32>
    %42 = vector.shape_cast %39 : vector<9x36xf32> to vector<1x9x36xf32>
    tpu.vector_store %arg3[%c0_16, %c0_17, %c0_18], %42 {strides = array<i32>} : memref<1x9x36xf32, #tpu.memory_space<vmem>>, vector<1x9x36xf32>,
    return
  }
  func.func @transform_0(%arg0: i32) -> (i32, i32, i32) {
    %c0_i32 = arith.constant 0 : i32
    %c0_i32_0 = arith.constant 0 : i32
    %c0_i32_1 = arith.constant 0 : i32
    return %arg0, %c0_i32, %c0_i32_0 : i32, i32, i32
  }
  func.func @transform_1(%arg0: i32) -> (i32, i32, i32) {
    %c0_i32 = arith.constant 0 : i32
    %c0_i32_0 = arith.constant 0 : i32
    %c0_i32_1 = arith.constant 0 : i32
    %c0_i32_2 = arith.constant 0 : i32
    return %c0_i32, %c0_i32_0, %c0_i32_1 : i32, i32, i32
  }
  func.func @transform_2(%arg0: i32) -> (i32, i32, i32) {
    %c0_i32 = arith.constant 0 : i32
    %c0_i32_0 = arith.constant 0 : i32
    %c0_i32_1 = arith.constant 0 : i32
    return %arg0, %c0_i32, %c0_i32_0 : i32, i32, i32
  }
}

</mosaic_0001>

<llo_original>
// kernel: pooling_layer.1
$region0: #{pooling_layer.1}
  #allocation0 [shape = 'u32[]', space=smem, size = 0x4, offset = 0x4, fixed_abs, tag = 'smem constant byte address 0x4 - core index']
  #allocation1 [shape = 'u32[72,128]{1,0:T(1,128)}', space=vmem, size = 0x9000, scoped, tag = 'internal scratch']
  %s0 = inlined_call_operand.vmem [shape: f32[2,16,64], index: 0, kind: input, shape index: {}]
  %s1 = inlined_call_operand.vmem [shape: f32[2,64,36], index: 1, kind: input, shape index: {}]
  %s2 = inlined_call_operand.vmem [shape: f32[2,9,36], index: 2, kind: output, shape index: {}]
  %s3 = sld [smem:[#allocation0]]
  $region41: #{pooling_layer.1} parent=0
    _
  %s5 = ssub.s32 1, %s3
  %s6 = scalar_select 0, %s5, %s3
  loop: start=0, step=1, limit=4
  $region2: #{pooling_layer.1} parent=0 // loop_pre_header
    _
  $region3: #{pooling_layer.1} parent=0 // loop_header
    %s8 = sphi 0, %s12
    %p9 = scmp.ge.s32.totalorder %s8, 4
    %s18 = sphi 0, %s20
    %s21 = sphi 0, %s18
    %s22 = sphi 0, %s21
    %s38 = sphi 0, %s22
    %s42 = sphi 0, %s42
    %s44 = sphi 0, %s42
    %s45 = sphi 0, %s44
    %s59 = sphi 0, %s45
    %s65 = sphi 0, %s67
    %s68 = sphi 0, %s65
    %s69 = sphi 0, %s68
    %s85 = sphi 0, %s69
  $region4: #{pooling_layer.1} parent=0 // loop_header_branch
    %11 = sbr.rel (%p9) target = $region8
  $region5: #{pooling_layer.1} parent=0 // loop_body
    %s13 = ssub.s32 %s8, 1
    %s14 = ssub.s32 %s8, 2
    %s15 = sadd.s32 %s8, 1
    %s16 = ssub.s32 %s8, %s15
    %p17 = scmp.eq.s32.totalorder %s16, 0
    %s19 = sadd.s32 %s18, 1
    %s20 = scalar_select %p17, %s18, %s19
    %p23 = pneg %p17
    %p24 = scmp.eq.s32.totalorder %s8, 1
    %p25 = por %p23, %p24
    %p26 = scmp.ne.s32.totalorder %s18, %s21
    %p27 = scmp.eq.s32.totalorder %s8, 0
    %p28 = por %p26, %p27
    %p29 = scmp.ne.s32.totalorder %s18, %s21
    %p30 = scmp.eq.s32.totalorder %s13, 1
    %p31 = por %p29, %p30
    %p32 = scmp.ne.s32.totalorder %s21, %s22
    %p33 = scmp.eq.s32.totalorder %s13, 0
    %p34 = por %p32, %p33
    %p35 = scmp.ne.s32.totalorder %s21, %s22
    %p36 = scmp.eq.s32.totalorder %s14, 1
    %p37 = por %p35, %p36
    %p39 = scmp.ne.s32.totalorder %s22, %s38
    %p40 = scmp.eq.s32.totalorder %s14, 0
    %p41 = por %p39, %p40
    %s43 = sadd.s32 %s42, 1
    %p46 = scmp.eq.s32.totalorder %s8, 1
    %p47 = scmp.ne.s32.totalorder %s42, %s44
    %p48 = scmp.eq.s32.totalorder %s8, 0
    %p49 = por %p47, %p48
    %p50 = scmp.ne.s32.totalorder %s42, %s44
    %p51 = scmp.eq.s32.totalorder %s13, 1
    %p52 = por %p50, %p51
    %p53 = scmp.ne.s32.totalorder %s44, %s45
    %p54 = scmp.eq.s32.totalorder %s13, 0
    %p55 = por %p53, %p54
    %p56 = scmp.ne.s32.totalorder %s44, %s45
    %p57 = scmp.eq.s32.totalorder %s14, 1
    %p58 = por %p56, %p57
    %p60 = scmp.ne.s32.totalorder %s45, %s59
    %p61 = scmp.eq.s32.totalorder %s14, 0
    %p62 = por %p60, %p61
    %s63 = ssub.s32 %s8, %s15
    %p64 = scmp.eq.s32.totalorder %s63, 0
    %s66 = sadd.s32 %s65, 1
    %s67 = scalar_select %p64, %s65, %s66
    %p70 = pneg %p64
    %p71 = scmp.eq.s32.totalorder %s8, 1
    %p72 = por %p70, %p71
    %p73 = scmp.ne.s32.totalorder %s65, %s68
    %p74 = scmp.eq.s32.totalorder %s8, 0
    %p75 = por %p73, %p74
    %p76 = scmp.ne.s32.totalorder %s65, %s68
    %p77 = scmp.eq.s32.totalorder %s13, 1
    %p78 = por %p76, %p77
    %p79 = scmp.ne.s32.totalorder %s68, %s69
    %p80 = scmp.eq.s32.totalorder %s13, 0
    %p81 = por %p79, %p80
    %p82 = scmp.ne.s32.totalorder %s68, %s69
    %p83 = scmp.eq.s32.totalorder %s14, 1
    %p84 = por %p82, %p83
    %p86 = scmp.ne.s32.totalorder %s69, %s85
    %p87 = scmp.eq.s32.totalorder %s14, 0
    %p88 = por %p86, %p87
    %p89 = scmp.le.s32.totalorder 1, %s8
    %p90 = scmp.lt.s32.totalorder %s8, 3
    %p91 = pnand %p89, %p90
    %p92 = pneg %p91
    // Predicated region
    $region9: #{pooling_layer.1} parent=5 // pred_check
      _
    $region10: #{pooling_layer.1} parent=5 // pred_check_branch
      %94 = sbr.rel (%p91) target = $region12
    $region11: #{pooling_layer.1} parent=5 // pred_region
      %s95 = ssub.s32 %s8, 1
      // Predicated region
      $region13: #{pooling_layer.1} parent=11 // pred_check
        %p96 = pneg %p55
      $region14: #{pooling_layer.1} parent=11 // pred_check_branch
        %98 = sbr.rel (%p96) target = $region16
      $region15: #{pooling_layer.1} parent=11 // pred_region
        _
      $region16: #{pooling_layer.1} parent=11 // pred_fallthru
        _
    $region12: #{pooling_layer.1} parent=5 // pred_fallthru
      _
    %p99 = scmp.lt.s32.totalorder %s8, 2
    // Predicated region
    $region17: #{pooling_layer.1} parent=5 // pred_check
      %p100 = pneg %p99
    $region18: #{pooling_layer.1} parent=5 // pred_check_branch
      %102 = sbr.rel (%p100) target = $region20
    $region19: #{pooling_layer.1} parent=5 // pred_region
      // Predicated region
      $region21: #{pooling_layer.1} parent=19 // pred_check
        %p103 = pneg %p28
      $region22: #{pooling_layer.1} parent=19 // pred_check_branch
        %105 = sbr.rel (%p103) target = $region24
      $region23: #{pooling_layer.1} parent=19 // pred_region
        %p106 = scmp.lt.s32.totalorder %s8, 1
        %s107 = scalar_select %p106, %s8, 1
        %s108 = smul.addr %s107, 2
        %s109 = smul.addr %s108, 8
        %s110 = scalar_lea.vmem %s0, %s109
      $region24: #{pooling_layer.1} parent=19 // pred_fallthru
        _
    $region20: #{pooling_layer.1} parent=5 // pred_fallthru
      _
    %p111 = scmp.le.s32.totalorder 1, %s8
    %p112 = scmp.lt.s32.totalorder %s8, 3
    %p113 = pnand %p111, %p112
    %p114 = pneg %p113
    // Predicated region
    $region25: #{pooling_layer.1} parent=5 // pred_check
      _
    $region26: #{pooling_layer.1} parent=5 // pred_check_branch
      %116 = sbr.rel (%p113) target = $region28
    $region27: #{pooling_layer.1} parent=5 // pred_region
      %s117 = ssub.s32 %s8, 1
      %p118 = scmp.lt.s32.totalorder %s13, 1
      %s119 = scalar_select %p118, %s13, 1
      %s120 = smul.addr %s119, 2
      %s121 = smul.addr %s120, 8
      %s122 = scalar_lea.vmem %s0, %s121
      %p123 = pneg %p34
      %p124 = pneg %p31
      %p125 = pneg %p55
      %p126 = pneg %p52
      %p127 = pneg %p81
      %p128 = pneg %p78
      %p129 = scmp.lt.s32.totalorder %s13, 1
      %s130 = scalar_select %p129, %s13, 1
      %s131 = smul.addr %s130, 2
      %s132 = smul.addr %s131, 8
      %s133 = scalar_lea.vmem %s2, %s132
      %p134 = scmp.lt.s32.totalorder %s13, 1
      %s135 = scalar_select %p134, %s13, 1
      %s136 = smul.addr %s135, 2
      %s137 = smul.addr %s136, 8
      %s138 = scalar_lea.vmem %s0, %s137
      %p139 = scmp.lt.s32.totalorder %s13, 1
      %s140 = scalar_select %p139, %s13, 1
      %s141 = smul.addr %s140, 2
      %s142 = smul.addr %s141, 8
      %s143 = scalar_lea.vmem %s2, %s142
      %v144 = vld [vmem:[%s138] sm:$0xff]
      %v145 = vld [vmem:[%s138 + $0x8] sm:$0xff]
      %v146 = vlaneseq
      %v147 = vshrl.u32 %v146, 7
      %v148 = vadd.s32 %v147, 8
      %v149 = vlaneseq
      %v150 = vand.u32 %v149, 127
      %v151 = vmul.u32 %v147, 2
      %v152 = vmul.u32 %v148, 2
      %v153 = vsub.s32 %v151, 1
      %v154 = vsub.s32 %v152, 1
      %vm155 = vcmp.gt.s32.totalorder %v153, 0
      %v156 = vsel %vm155, %v153, 0
      %vm157 = vcmp.gt.s32.totalorder %v154, 0
      %v158 = vsel %vm157, %v154, 0
      %vm159 = vcmp.lt.s32.totalorder %v156, 15
      %v160 = vsel %vm159, %v156, 15
      %vm161 = vcmp.lt.s32.totalorder %v158, 15
      %v162 = vsel %vm161, %v158, 15
      %vm163 = vcmp.eq.s32.totalorder %v150, %v160
      %vm164 = vcmp.eq.s32.totalorder %v150, %v162
      %v165 = vsel %vm163, 1, 0
      %v166 = vsel %vm164, 1, 0
      %v167 = vcvt.s32.f32 %v165
      %v168 = vcvt.s32.f32 %v166
      %vm169 = vcmask 130048
      %v171 = vsel %vm169, %v167, 0
      %v174 = vsel %vm169, %v168, 0
      %176 = vmatpush.msra.mxu0 0.0
      %177 = vmatpush.msra.mxu0 0.0
      %178 = vmatpush.msra.mxu0 0.0
      %179 = vmatpush.msra.mxu0 0.0
      %180 = vmatpush.msra.mxu0 0.0
      %181 = vmatpush.msra.mxu0 0.0
      %182 = vmatpush.msra.mxu0 0.0
      %183 = vmatpush.msra.mxu0 0.0
      %184 = vmatpush.msra.mxu0 0.0
      %185 = vmatpush.msra.mxu0 0.0
      %186 = vmatpush.msra.mxu0 0.0
      %187 = vmatpush.msra.mxu0 0.0
      %188 = vmatpush.msra.mxu0 0.0
      %189 = vmatpush.msra.mxu0 0.0
      %v190 = vand.u32 %v145, 4294901760
      %191 = vmatpush.msra.mxu0 %v190
      %v192 = vand.u32 %v144, 4294901760
      %193 = vmatpush.msra.mxu0 %v192
      %v194 = vand.u32 %v171, 4294901760
      %v195 = vsub.f32 %v171, %v194
      %v196 = vand.u32 %v195, 4294901760
      %v197 = vsub.f32 %v195, %v196
      %v198 = vand.u32 %v197, 4294901760
      %199 = vmatmul.f32.gmra.mxu0 %v198
      %v200 = vpop.f32.mrf.mxu0
      %v201 = vadd.f32 0.0, %v200
      %v202 = vand.u32 %v174, 4294901760
      %v203 = vsub.f32 %v174, %v202
      %v204 = vand.u32 %v203, 4294901760
      %v205 = vsub.f32 %v203, %v204
      %v206 = vand.u32 %v205, 4294901760
      %207 = vmatmul.f32.gmra.mxu0 %v206
      %v208 = vpop.f32.mrf.mxu0
      %v209 = vadd.f32 0.0, %v208
      %210 = vdwg.mxu0
      %211 = vmatpush.msra.mxu0 0.0
      %212 = vmatpush.msra.mxu0 0.0
      %213 = vmatpush.msra.mxu0 0.0
      %214 = vmatpush.msra.mxu0 0.0
      %215 = vmatpush.msra.mxu0 0.0
      %216 = vmatpush.msra.mxu0 0.0
      %217 = vmatpush.msra.mxu0 0.0
      %218 = vmatpush.msra.mxu0 0.0
      %219 = vmatpush.msra.mxu0 0.0
      %220 = vmatpush.msra.mxu0 0.0
      %221 = vmatpush.msra.mxu0 0.0
      %222 = vmatpush.msra.mxu0 0.0
      %223 = vmatpush.msra.mxu0 0.0
      %224 = vmatpush.msra.mxu0 0.0
      %v225 = vand.u32 %v145, 4294901760
      %v226 = vsub.f32 %v145, %v225
      %v227 = vand.u32 %v226, 4294901760
      %v228 = vsub.f32 %v226, %v227
      %v229 = vand.u32 %v228, 4294901760
      %230 = vmatpush.msra.mxu0 %v229
      %v231 = vand.u32 %v144, 4294901760
      %v232 = vsub.f32 %v144, %v231
      %v233 = vand.u32 %v232, 4294901760
      %v234 = vsub.f32 %v232, %v233
      %v235 = vand.u32 %v234, 4294901760
      %236 = vmatpush.msra.mxu0 %v235
      %v237 = vand.u32 %v171, 4294901760
      %238 = vmatmul.f32.gmra.mxu0 %v237
      %v239 = vpop.f32.mrf.mxu0
      %v240 = vadd.f32 %v201, %v239
      %v241 = vand.u32 %v174, 4294901760
      %242 = vmatmul.f32.gmra.mxu0 %v241
      %v243 = vpop.f32.mrf.mxu0
      %v244 = vadd.f32 %v209, %v243
      %245 = vdwg.mxu0
      %246 = vmatpush.msra.mxu0 0.0
      %247 = vmatpush.msra.mxu0 0.0
      %248 = vmatpush.msra.mxu0 0.0
      %249 = vmatpush.msra.mxu0 0.0
      %250 = vmatpush.msra.mxu0 0.0
      %251 = vmatpush.msra.mxu0 0.0
      %252 = vmatpush.msra.mxu0 0.0
      %253 = vmatpush.msra.mxu0 0.0
      %254 = vmatpush.msra.mxu0 0.0
      %255 = vmatpush.msra.mxu0 0.0
      %256 = vmatpush.msra.mxu0 0.0
      %257 = vmatpush.msra.mxu0 0.0
      %258 = vmatpush.msra.mxu0 0.0
      %259 = vmatpush.msra.mxu0 0.0
      %v260 = vand.u32 %v145, 4294901760
      %v261 = vsub.f32 %v145, %v260
      %262 = vmatpush.msra.mxu0 %v261
      %v263 = vand.u32 %v144, 4294901760
      %v264 = vsub.f32 %v144, %v263
      %265 = vmatpush.msra.mxu0 %v264
      %v266 = vand.u32 %v171, 4294901760
      %v267 = vsub.f32 %v171, %v266
      %268 = vmatmul.f32.gmra.mxu0 %v267
      %v269 = vpop.f32.mrf.mxu0
      %v270 = vadd.f32 %v240, %v269
      %v271 = vand.u32 %v174, 4294901760
      %v272 = vsub.f32 %v174, %v271
      %273 = vmatmul.f32.gmra.mxu0 %v272
      %v274 = vpop.f32.mrf.mxu0
      %v275 = vadd.f32 %v244, %v274
      %276 = vdwg.mxu0
      %277 = vmatpush.msra.mxu0 0.0
      %278 = vmatpush.msra.mxu0 0.0
      %279 = vmatpush.msra.mxu0 0.0
      %280 = vmatpush.msra.mxu0 0.0
      %281 = vmatpush.msra.mxu0 0.0
      %282 = vmatpush.msra.mxu0 0.0
      %283 = vmatpush.msra.mxu0 0.0
      %284 = vmatpush.msra.mxu0 0.0
      %285 = vmatpush.msra.mxu0 0.0
      %286 = vmatpush.msra.mxu0 0.0
      %287 = vmatpush.msra.mxu0 0.0
      %288 = vmatpush.msra.mxu0 0.0
      %289 = vmatpush.msra.mxu0 0.0
      %290 = vmatpush.msra.mxu0 0.0
      %v291 = vand.u32 %v145, 4294901760
      %292 = vmatpush.msra.mxu0 %v291
      %v293 = vand.u32 %v144, 4294901760
      %294 = vmatpush.msra.mxu0 %v293
      %v295 = vand.u32 %v171, 4294901760
      %v296 = vsub.f32 %v171, %v295
      %v297 = vand.u32 %v296, 4294901760
      %298 = vmatmul.f32.gmra.mxu0 %v297
      %v299 = vpop.f32.mrf.mxu0
      %v300 = vadd.f32 %v270, %v299
      %v301 = vand.u32 %v174, 4294901760
      %v302 = vsub.f32 %v174, %v301
      %v303 = vand.u32 %v302, 4294901760
      %304 = vmatmul.f32.gmra.mxu0 %v303
      %v305 = vpop.f32.mrf.mxu0
      %v306 = vadd.f32 %v275, %v305
      %307 = vdwg.mxu0
      %308 = vmatpush.msra.mxu0 0.0
      %309 = vmatpush.msra.mxu0 0.0
      %310 = vmatpush.msra.mxu0 0.0
      %311 = vmatpush.msra.mxu0 0.0
      %312 = vmatpush.msra.mxu0 0.0
      %313 = vmatpush.msra.mxu0 0.0
      %314 = vmatpush.msra.mxu0 0.0
      %315 = vmatpush.msra.mxu0 0.0
      %316 = vmatpush.msra.mxu0 0.0
      %317 = vmatpush.msra.mxu0 0.0
      %318 = vmatpush.msra.mxu0 0.0
      %319 = vmatpush.msra.mxu0 0.0
      %320 = vmatpush.msra.mxu0 0.0
      %321 = vmatpush.msra.mxu0 0.0
      %v322 = vand.u32 %v145, 4294901760
      %v323 = vsub.f32 %v145, %v322
      %v324 = vand.u32 %v323, 4294901760
      %325 = vmatpush.msra.mxu0 %v324
      %v326 = vand.u32 %v144, 4294901760
      %v327 = vsub.f32 %v144, %v326
      %v328 = vand.u32 %v327, 4294901760
      %329 = vmatpush.msra.mxu0 %v328
      %v330 = vand.u32 %v171, 4294901760
      %331 = vmatmul.f32.gmra.mxu0 %v330
      %v332 = vpop.f32.mrf.mxu0
      %v333 = vadd.f32 %v300, %v332
      %v334 = vand.u32 %v174, 4294901760
      %335 = vmatmul.f32.gmra.mxu0 %v334
      %v336 = vpop.f32.mrf.mxu0
      %v337 = vadd.f32 %v306, %v336
      %338 = vdwg.mxu0
      %339 = vmatpush.msra.mxu0 0.0
      %340 = vmatpush.msra.mxu0 0.0
      %341 = vmatpush.msra.mxu0 0.0
      %342 = vmatpush.msra.mxu0 0.0
      %343 = vmatpush.msra.mxu0 0.0
      %344 = vmatpush.msra.mxu0 0.0
      %345 = vmatpush.msra.mxu0 0.0
      %346 = vmatpush.msra.mxu0 0.0
      %347 = vmatpush.msra.mxu0 0.0
      %348 = vmatpush.msra.mxu0 0.0
      %349 = vmatpush.msra.mxu0 0.0
      %350 = vmatpush.msra.mxu0 0.0
      %351 = vmatpush.msra.mxu0 0.0
      %352 = vmatpush.msra.mxu0 0.0
      %v353 = vand.u32 %v145, 4294901760
      %354 = vmatpush.msra.mxu0 %v353
      %v355 = vand.u32 %v144, 4294901760
      %356 = vmatpush.msra.mxu0 %v355
      %v357 = vand.u32 %v171, 4294901760
      %358 = vmatmul.f32.gmra.mxu0 %v357
      %v359 = vpop.f32.mrf.mxu0
      %v360 = vadd.f32 %v333, %v359
      %v361 = vand.u32 %v174, 4294901760
      %362 = vmatmul.f32.gmra.mxu0 %v361
      %v363 = vpop.f32.mrf.mxu0
      %v364 = vadd.f32 %v337, %v363
      %365 = vdwg.mxu0
      %vm366 = vcmp.gt.s32.totalorder %v151, 0
      %v367 = vsel %vm366, %v151, 0
      %vm368 = vcmp.gt.s32.totalorder %v152, 0
      %v369 = vsel %vm368, %v152, 0
      %vm370 = vcmp.lt.s32.totalorder %v367, 15
      %v371 = vsel %vm370, %v367, 15
      %vm372 = vcmp.lt.s32.totalorder %v369, 15
      %v373 = vsel %vm372, %v369, 15
      %vm374 = vcmp.eq.s32.totalorder %v150, %v371
      %vm375 = vcmp.eq.s32.totalorder %v150, %v373
      %v376 = vsel %vm374, 1, 0
      %v377 = vsel %vm375, 1, 0
      %v378 = vcvt.s32.f32 %v376
      %v379 = vcvt.s32.f32 %v377
      %v381 = vsel %vm169, %v378, 0
      %v384 = vsel %vm169, %v379, 0
      %386 = vmatpush.msra.mxu0 0.0
      %387 = vmatpush.msra.mxu0 0.0
      %388 = vmatpush.msra.mxu0 0.0
      %389 = vmatpush.msra.mxu0 0.0
      %390 = vmatpush.msra.mxu0 0.0
      %391 = vmatpush.msra.mxu0 0.0
      %392 = vmatpush.msra.mxu0 0.0
      %393 = vmatpush.msra.mxu0 0.0
      %394 = vmatpush.msra.mxu0 0.0
      %395 = vmatpush.msra.mxu0 0.0
      %396 = vmatpush.msra.mxu0 0.0
      %397 = vmatpush.msra.mxu0 0.0
      %398 = vmatpush.msra.mxu0 0.0
      %399 = vmatpush.msra.mxu0 0.0
      %v400 = vand.u32 %v145, 4294901760
      %401 = vmatpush.msra.mxu0 %v400
      %v402 = vand.u32 %v144, 4294901760
      %403 = vmatpush.msra.mxu0 %v402
      %v404 = vand.u32 %v381, 4294901760
      %v405 = vsub.f32 %v381, %v404
      %v406 = vand.u32 %v405, 4294901760
      %v407 = vsub.f32 %v405, %v406
      %v408 = vand.u32 %v407, 4294901760
      %409 = vmatmul.f32.gmra.mxu0 %v408
      %v410 = vpop.f32.mrf.mxu0
      %v411 = vadd.f32 0.0, %v410
      %v412 = vand.u32 %v384, 4294901760
      %v413 = vsub.f32 %v384, %v412
      %v414 = vand.u32 %v413, 4294901760
      %v415 = vsub.f32 %v413, %v414
      %v416 = vand.u32 %v415, 4294901760
      %417 = vmatmul.f32.gmra.mxu0 %v416
      %v418 = vpop.f32.mrf.mxu0
      %v419 = vadd.f32 0.0, %v418
      %420 = vdwg.mxu0
      %421 = vmatpush.msra.mxu0 0.0
      %422 = vmatpush.msra.mxu0 0.0
      %423 = vmatpush.msra.mxu0 0.0
      %424 = vmatpush.msra.mxu0 0.0
      %425 = vmatpush.msra.mxu0 0.0
      %426 = vmatpush.msra.mxu0 0.0
      %427 = vmatpush.msra.mxu0 0.0
      %428 = vmatpush.msra.mxu0 0.0
      %429 = vmatpush.msra.mxu0 0.0
      %430 = vmatpush.msra.mxu0 0.0
      %431 = vmatpush.msra.mxu0 0.0
      %432 = vmatpush.msra.mxu0 0.0
      %433 = vmatpush.msra.mxu0 0.0
      %434 = vmatpush.msra.mxu0 0.0
      %v435 = vand.u32 %v145, 4294901760
      %v436 = vsub.f32 %v145, %v435
      %v437 = vand.u32 %v436, 4294901760
      %v438 = vsub.f32 %v436, %v437
      %v439 = vand.u32 %v438, 4294901760
      %440 = vmatpush.msra.mxu0 %v439
      %v441 = vand.u32 %v144, 4294901760
      %v442 = vsub.f32 %v144, %v441
      %v443 = vand.u32 %v442, 4294901760
      %v444 = vsub.f32 %v442, %v443
      %v445 = vand.u32 %v444, 4294901760
      %446 = vmatpush.msra.mxu0 %v445
      %v447 = vand.u32 %v381, 4294901760
      %448 = vmatmul.f32.gmra.mxu0 %v447
      %v449 = vpop.f32.mrf.mxu0
      %v450 = vadd.f32 %v411, %v449
      %v451 = vand.u32 %v384, 4294901760
      %452 = vmatmul.f32.gmra.mxu0 %v451
      %v453 = vpop.f32.mrf.mxu0
      %v454 = vadd.f32 %v419, %v453
      %455 = vdwg.mxu0
      %456 = vmatpush.msra.mxu0 0.0
      %457 = vmatpush.msra.mxu0 0.0
      %458 = vmatpush.msra.mxu0 0.0
      %459 = vmatpush.msra.mxu0 0.0
      %460 = vmatpush.msra.mxu0 0.0
      %461 = vmatpush.msra.mxu0 0.0
      %462 = vmatpush.msra.mxu0 0.0
      %463 = vmatpush.msra.mxu0 0.0
      %464 = vmatpush.msra.mxu0 0.0
      %465 = vmatpush.msra.mxu0 0.0
      %466 = vmatpush.msra.mxu0 0.0
      %467 = vmatpush.msra.mxu0 0.0
      %468 = vmatpush.msra.mxu0 0.0
      %469 = vmatpush.msra.mxu0 0.0
      %v470 = vand.u32 %v145, 4294901760
      %v471 = vsub.f32 %v145, %v470
      %472 = vmatpush.msra.mxu0 %v471
      %v473 = vand.u32 %v144, 4294901760
      %v474 = vsub.f32 %v144, %v473
      %475 = vmatpush.msra.mxu0 %v474
      %v476 = vand.u32 %v381, 4294901760
      %v477 = vsub.f32 %v381, %v476
      %478 = vmatmul.f32.gmra.mxu0 %v477
      %v479 = vpop.f32.mrf.mxu0
      %v480 = vadd.f32 %v450, %v479
      %v481 = vand.u32 %v384, 4294901760
      %v482 = vsub.f32 %v384, %v481
      %483 = vmatmul.f32.gmra.mxu0 %v482
      %v484 = vpop.f32.mrf.mxu0
      %v485 = vadd.f32 %v454, %v484
      %486 = vdwg.mxu0
      %487 = vmatpush.msra.mxu0 0.0
      %488 = vmatpush.msra.mxu0 0.0
      %489 = vmatpush.msra.mxu0 0.0
      %490 = vmatpush.msra.mxu0 0.0
      %491 = vmatpush.msra.mxu0 0.0
      %492 = vmatpush.msra.mxu0 0.0
      %493 = vmatpush.msra.mxu0 0.0
      %494 = vmatpush.msra.mxu0 0.0
      %495 = vmatpush.msra.mxu0 0.0
      %496 = vmatpush.msra.mxu0 0.0
      %497 = vmatpush.msra.mxu0 0.0
      %498 = vmatpush.msra.mxu0 0.0
      %499 = vmatpush.msra.mxu0 0.0
      %500 = vmatpush.msra.mxu0 0.0
      %v501 = vand.u32 %v145, 4294901760
      %502 = vmatpush.msra.mxu0 %v501
      %v503 = vand.u32 %v144, 4294901760
      %504 = vmatpush.msra.mxu0 %v503
      %v505 = vand.u32 %v381, 4294901760
      %v506 = vsub.f32 %v381, %v505
      %v507 = vand.u32 %v506, 4294901760
      %508 = vmatmul.f32.gmra.mxu0 %v507
      %v509 = vpop.f32.mrf.mxu0
      %v510 = vadd.f32 %v480, %v509
      %v511 = vand.u32 %v384, 4294901760
      %v512 = vsub.f32 %v384, %v511
      %v513 = vand.u32 %v512, 4294901760
      %514 = vmatmul.f32.gmra.mxu0 %v513
      %v515 = vpop.f32.mrf.mxu0
      %v516 = vadd.f32 %v485, %v515
      %517 = vdwg.mxu0
      %518 = vmatpush.msra.mxu0 0.0
      %519 = vmatpush.msra.mxu0 0.0
      %520 = vmatpush.msra.mxu0 0.0
      %521 = vmatpush.msra.mxu0 0.0
      %522 = vmatpush.msra.mxu0 0.0
      %523 = vmatpush.msra.mxu0 0.0
      %524 = vmatpush.msra.mxu0 0.0
      %525 = vmatpush.msra.mxu0 0.0
      %526 = vmatpush.msra.mxu0 0.0
      %527 = vmatpush.msra.mxu0 0.0
      %528 = vmatpush.msra.mxu0 0.0
      %529 = vmatpush.msra.mxu0 0.0
      %530 = vmatpush.msra.mxu0 0.0
      %531 = vmatpush.msra.mxu0 0.0
      %v532 = vand.u32 %v145, 4294901760
      %v533 = vsub.f32 %v145, %v532
      %v534 = vand.u32 %v533, 4294901760
      %535 = vmatpush.msra.mxu0 %v534
      %v536 = vand.u32 %v144, 4294901760
      %v537 = vsub.f32 %v144, %v536
      %v538 = vand.u32 %v537, 4294901760
      %539 = vmatpush.msra.mxu0 %v538
      %v540 = vand.u32 %v381, 4294901760
      %541 = vmatmul.f32.gmra.mxu0 %v540
      %v542 = vpop.f32.mrf.mxu0
      %v543 = vadd.f32 %v510, %v542
      %v544 = vand.u32 %v384, 4294901760
      %545 = vmatmul.f32.gmra.mxu0 %v544
      %v546 = vpop.f32.mrf.mxu0
      %v547 = vadd.f32 %v516, %v546
      %548 = vdwg.mxu0
      %549 = vmatpush.msra.mxu0 0.0
      %550 = vmatpush.msra.mxu0 0.0
      %551 = vmatpush.msra.mxu0 0.0
      %552 = vmatpush.msra.mxu0 0.0
      %553 = vmatpush.msra.mxu0 0.0
      %554 = vmatpush.msra.mxu0 0.0
      %555 = vmatpush.msra.mxu0 0.0
      %556 = vmatpush.msra.mxu0 0.0
      %557 = vmatpush.msra.mxu0 0.0
      %558 = vmatpush.msra.mxu0 0.0
      %559 = vmatpush.msra.mxu0 0.0
      %560 = vmatpush.msra.mxu0 0.0
      %561 = vmatpush.msra.mxu0 0.0
      %562 = vmatpush.msra.mxu0 0.0
      %v563 = vand.u32 %v145, 4294901760
      %564 = vmatpush.msra.mxu0 %v563
      %v565 = vand.u32 %v144, 4294901760
      %566 = vmatpush.msra.mxu0 %v565
      %v567 = vand.u32 %v381, 4294901760
      %568 = vmatmul.f32.gmra.mxu0 %v567
      %v569 = vpop.f32.mrf.mxu0
      %v570 = vadd.f32 %v543, %v569
      %v571 = vand.u32 %v384, 4294901760
      %572 = vmatmul.f32.gmra.mxu0 %v571
      %v573 = vpop.f32.mrf.mxu0
      %v574 = vadd.f32 %v547, %v573
      %575 = vdwg.mxu0
      %v576 = vmax.f32 %v360, %v570
      %v577 = vmax.f32 %v364, %v574
      %v578 = vld [vmem:[%s1] sm:$0xff]
      %v579 = vld [vmem:[%s1 + $0x8] sm:$0xff]
      %v580 = vld [vmem:[%s1 + $0x10] sm:$0xff]
      %v581 = vld [vmem:[%s1 + $0x18] sm:$0xff]
      %v582 = vld [vmem:[%s1 + $0x20] sm:$0xff]
      %v583 = vld [vmem:[%s1 + $0x28] sm:$0xff]
      %v584 = vld [vmem:[%s1 + $0x30] sm:$0xff]
      %v585 = vld [vmem:[%s1 + $0x38] sm:$0xff]
      %vm586 = vcmask 523264
      %v588 = vsel %vm586, %v576, 0
      %v591 = vsel %vm586, %v577, 0
      %593 = vmatpush.msra.mxu0 0.0
      %594 = vmatpush.msra.mxu0 0.0
      %595 = vmatpush.msra.mxu0 0.0
      %596 = vmatpush.msra.mxu0 0.0
      %597 = vmatpush.msra.mxu0 0.0
      %598 = vmatpush.msra.mxu0 0.0
      %599 = vmatpush.msra.mxu0 0.0
      %600 = vmatpush.msra.mxu0 0.0
      %v601 = vand.u32 %v585, 4294901760
      %602 = vmatpush.msra.mxu0 %v601
      %v603 = vand.u32 %v584, 4294901760
      %604 = vmatpush.msra.mxu0 %v603
      %v605 = vand.u32 %v583, 4294901760
      %606 = vmatpush.msra.mxu0 %v605
      %v607 = vand.u32 %v582, 4294901760
      %608 = vmatpush.msra.mxu0 %v607
      %v609 = vand.u32 %v581, 4294901760
      %610 = vmatpush.msra.mxu0 %v609
      %v611 = vand.u32 %v580, 4294901760
      %612 = vmatpush.msra.mxu0 %v611
      %v613 = vand.u32 %v579, 4294901760
      %614 = vmatpush.msra.mxu0 %v613
      %v615 = vand.u32 %v578, 4294901760
      %616 = vmatpush.msra.mxu0 %v615
      %v617 = vand.u32 %v588, 4294901760
      %v618 = vsub.f32 %v588, %v617
      %v619 = vand.u32 %v618, 4294901760
      %v620 = vsub.f32 %v618, %v619
      %v621 = vand.u32 %v620, 4294901760
      %622 = vmatmul.f32.gmra.mxu0 %v621
      %v623 = vpop.f32.mrf.mxu0
      %v624 = vadd.f32 0.0, %v623
      %v625 = vand.u32 %v591, 4294901760
      %v626 = vsub.f32 %v591, %v625
      %v627 = vand.u32 %v626, 4294901760
      %v628 = vsub.f32 %v626, %v627
      %v629 = vand.u32 %v628, 4294901760
      %630 = vmatmul.f32.gmra.mxu0 %v629
      %v631 = vpop.f32.mrf.mxu0
      %v632 = vadd.f32 0.0, %v631
      %633 = vdwg.mxu0
      %634 = vmatpush.msra.mxu0 0.0
      %635 = vmatpush.msra.mxu0 0.0
      %636 = vmatpush.msra.mxu0 0.0
      %637 = vmatpush.msra.mxu0 0.0
      %638 = vmatpush.msra.mxu0 0.0
      %639 = vmatpush.msra.mxu0 0.0
      %640 = vmatpush.msra.mxu0 0.0
      %641 = vmatpush.msra.mxu0 0.0
      %v642 = vand.u32 %v585, 4294901760
      %v643 = vsub.f32 %v585, %v642
      %v644 = vand.u32 %v643, 4294901760
      %v645 = vsub.f32 %v643, %v644
      %v646 = vand.u32 %v645, 4294901760
      %647 = vmatpush.msra.mxu0 %v646
      %v648 = vand.u32 %v584, 4294901760
      %v649 = vsub.f32 %v584, %v648
      %v650 = vand.u32 %v649, 4294901760
      %v651 = vsub.f32 %v649, %v650
      %v652 = vand.u32 %v651, 4294901760
      %653 = vmatpush.msra.mxu0 %v652
      %v654 = vand.u32 %v583, 4294901760
      %v655 = vsub.f32 %v583, %v654
      %v656 = vand.u32 %v655, 4294901760
      %v657 = vsub.f32 %v655, %v656
      %v658 = vand.u32 %v657, 4294901760
      %659 = vmatpush.msra.mxu0 %v658
      %v660 = vand.u32 %v582, 4294901760
      %v661 = vsub.f32 %v582, %v660
      %v662 = vand.u32 %v661, 4294901760
      %v663 = vsub.f32 %v661, %v662
      %v664 = vand.u32 %v663, 4294901760
      %665 = vmatpush.msra.mxu0 %v664
      %v666 = vand.u32 %v581, 4294901760
      %v667 = vsub.f32 %v581, %v666
      %v668 = vand.u32 %v667, 4294901760
      %v669 = vsub.f32 %v667, %v668
      %v670 = vand.u32 %v669, 4294901760
      %671 = vmatpush.msra.mxu0 %v670
      %v672 = vand.u32 %v580, 4294901760
      %v673 = vsub.f32 %v580, %v672
      %v674 = vand.u32 %v673, 4294901760
      %v675 = vsub.f32 %v673, %v674
      %v676 = vand.u32 %v675, 4294901760
      %677 = vmatpush.msra.mxu0 %v676
      %v678 = vand.u32 %v579, 4294901760
      %v679 = vsub.f32 %v579, %v678
      %v680 = vand.u32 %v679, 4294901760
      %v681 = vsub.f32 %v679, %v680
      %v682 = vand.u32 %v681, 4294901760
      %683 = vmatpush.msra.mxu0 %v682
      %v684 = vand.u32 %v578, 4294901760
      %v685 = vsub.f32 %v578, %v684
      %v686 = vand.u32 %v685, 4294901760
      %v687 = vsub.f32 %v685, %v686
      %v688 = vand.u32 %v687, 4294901760
      %689 = vmatpush.msra.mxu0 %v688
      %v690 = vand.u32 %v588, 4294901760
      %691 = vmatmul.f32.gmra.mxu0 %v690
      %v692 = vpop.f32.mrf.mxu0
      %v693 = vadd.f32 %v624, %v692
      %v694 = vand.u32 %v591, 4294901760
      %695 = vmatmul.f32.gmra.mxu0 %v694
      %v696 = vpop.f32.mrf.mxu0
      %v697 = vadd.f32 %v632, %v696
      %698 = vdwg.mxu0
      %699 = vmatpush.msra.mxu0 0.0
      %700 = vmatpush.msra.mxu0 0.0
      %701 = vmatpush.msra.mxu0 0.0
      %702 = vmatpush.msra.mxu0 0.0
      %703 = vmatpush.msra.mxu0 0.0
      %704 = vmatpush.msra.mxu0 0.0
      %705 = vmatpush.msra.mxu0 0.0
      %706 = vmatpush.msra.mxu0 0.0
      %v707 = vand.u32 %v585, 4294901760
      %v708 = vsub.f32 %v585, %v707
      %709 = vmatpush.msra.mxu0 %v708
      %v710 = vand.u32 %v584, 4294901760
      %v711 = vsub.f32 %v584, %v710
      %712 = vmatpush.msra.mxu0 %v711
      %v713 = vand.u32 %v583, 4294901760
      %v714 = vsub.f32 %v583, %v713
      %715 = vmatpush.msra.mxu0 %v714
      %v716 = vand.u32 %v582, 4294901760
      %v717 = vsub.f32 %v582, %v716
      %718 = vmatpush.msra.mxu0 %v717
      %v719 = vand.u32 %v581, 4294901760
      %v720 = vsub.f32 %v581, %v719
      %721 = vmatpush.msra.mxu0 %v720
      %v722 = vand.u32 %v580, 4294901760
      %v723 = vsub.f32 %v580, %v722
      %724 = vmatpush.msra.mxu0 %v723
      %v725 = vand.u32 %v579, 4294901760
      %v726 = vsub.f32 %v579, %v725
      %727 = vmatpush.msra.mxu0 %v726
      %v728 = vand.u32 %v578, 4294901760
      %v729 = vsub.f32 %v578, %v728
      %730 = vmatpush.msra.mxu0 %v729
      %v731 = vand.u32 %v588, 4294901760
      %v732 = vsub.f32 %v588, %v731
      %733 = vmatmul.f32.gmra.mxu0 %v732
      %v734 = vpop.f32.mrf.mxu0
      %v735 = vadd.f32 %v693, %v734
      %v736 = vand.u32 %v591, 4294901760
      %v737 = vsub.f32 %v591, %v736
      %738 = vmatmul.f32.gmra.mxu0 %v737
      %v739 = vpop.f32.mrf.mxu0
      %v740 = vadd.f32 %v697, %v739
      %741 = vdwg.mxu0
      %742 = vmatpush.msra.mxu0 0.0
      %743 = vmatpush.msra.mxu0 0.0
      %744 = vmatpush.msra.mxu0 0.0
      %745 = vmatpush.msra.mxu0 0.0
      %746 = vmatpush.msra.mxu0 0.0
      %747 = vmatpush.msra.mxu0 0.0
      %748 = vmatpush.msra.mxu0 0.0
      %749 = vmatpush.msra.mxu0 0.0
      %v750 = vand.u32 %v585, 4294901760
      %751 = vmatpush.msra.mxu0 %v750
      %v752 = vand.u32 %v584, 4294901760
      %753 = vmatpush.msra.mxu0 %v752
      %v754 = vand.u32 %v583, 4294901760
      %755 = vmatpush.msra.mxu0 %v754
      %v756 = vand.u32 %v582, 4294901760
      %757 = vmatpush.msra.mxu0 %v756
      %v758 = vand.u32 %v581, 4294901760
      %759 = vmatpush.msra.mxu0 %v758
      %v760 = vand.u32 %v580, 4294901760
      %761 = vmatpush.msra.mxu0 %v760
      %v762 = vand.u32 %v579, 4294901760
      %763 = vmatpush.msra.mxu0 %v762
      %v764 = vand.u32 %v578, 4294901760
      %765 = vmatpush.msra.mxu0 %v764
      %v766 = vand.u32 %v588, 4294901760
      %v767 = vsub.f32 %v588, %v766
      %v768 = vand.u32 %v767, 4294901760
      %769 = vmatmul.f32.gmra.mxu0 %v768
      %v770 = vpop.f32.mrf.mxu0
      %v771 = vadd.f32 %v735, %v770
      %v772 = vand.u32 %v591, 4294901760
      %v773 = vsub.f32 %v591, %v772
      %v774 = vand.u32 %v773, 4294901760
      %775 = vmatmul.f32.gmra.mxu0 %v774
      %v776 = vpop.f32.mrf.mxu0
      %v777 = vadd.f32 %v740, %v776
      %778 = vdwg.mxu0
      %779 = vmatpush.msra.mxu0 0.0
      %780 = vmatpush.msra.mxu0 0.0
      %781 = vmatpush.msra.mxu0 0.0
      %782 = vmatpush.msra.mxu0 0.0
      %783 = vmatpush.msra.mxu0 0.0
      %784 = vmatpush.msra.mxu0 0.0
      %785 = vmatpush.msra.mxu0 0.0
      %786 = vmatpush.msra.mxu0 0.0
      %v787 = vand.u32 %v585, 4294901760
      %v788 = vsub.f32 %v585, %v787
      %v789 = vand.u32 %v788, 4294901760
      %790 = vmatpush.msra.mxu0 %v789
      %v791 = vand.u32 %v584, 4294901760
      %v792 = vsub.f32 %v584, %v791
      %v793 = vand.u32 %v792, 4294901760
      %794 = vmatpush.msra.mxu0 %v793
      %v795 = vand.u32 %v583, 4294901760
      %v796 = vsub.f32 %v583, %v795
      %v797 = vand.u32 %v796, 4294901760
      %798 = vmatpush.msra.mxu0 %v797
      %v799 = vand.u32 %v582, 4294901760
      %v800 = vsub.f32 %v582, %v799
      %v801 = vand.u32 %v800, 4294901760
      %802 = vmatpush.msra.mxu0 %v801
      %v803 = vand.u32 %v581, 4294901760
      %v804 = vsub.f32 %v581, %v803
      %v805 = vand.u32 %v804, 4294901760
      %806 = vmatpush.msra.mxu0 %v805
      %v807 = vand.u32 %v580, 4294901760
      %v808 = vsub.f32 %v580, %v807
      %v809 = vand.u32 %v808, 4294901760
      %810 = vmatpush.msra.mxu0 %v809
      %v811 = vand.u32 %v579, 4294901760
      %v812 = vsub.f32 %v579, %v811
      %v813 = vand.u32 %v812, 4294901760
      %814 = vmatpush.msra.mxu0 %v813
      %v815 = vand.u32 %v578, 4294901760
      %v816 = vsub.f32 %v578, %v815
      %v817 = vand.u32 %v816, 4294901760
      %818 = vmatpush.msra.mxu0 %v817
      %v819 = vand.u32 %v588, 4294901760
      %820 = vmatmul.f32.gmra.mxu0 %v819
      %v821 = vpop.f32.mrf.mxu0
      %v822 = vadd.f32 %v771, %v821
      %v823 = vand.u32 %v591, 4294901760
      %824 = vmatmul.f32.gmra.mxu0 %v823
      %v825 = vpop.f32.mrf.mxu0
      %v826 = vadd.f32 %v777, %v825
      %827 = vdwg.mxu0
      %828 = vmatpush.msra.mxu0 0.0
      %829 = vmatpush.msra.mxu0 0.0
      %830 = vmatpush.msra.mxu0 0.0
      %831 = vmatpush.msra.mxu0 0.0
      %832 = vmatpush.msra.mxu0 0.0
      %833 = vmatpush.msra.mxu0 0.0
      %834 = vmatpush.msra.mxu0 0.0
      %835 = vmatpush.msra.mxu0 0.0
      %v836 = vand.u32 %v585, 4294901760
      %837 = vmatpush.msra.mxu0 %v836
      %v838 = vand.u32 %v584, 4294901760
      %839 = vmatpush.msra.mxu0 %v838
      %v840 = vand.u32 %v583, 4294901760
      %841 = vmatpush.msra.mxu0 %v840
      %v842 = vand.u32 %v582, 4294901760
      %843 = vmatpush.msra.mxu0 %v842
      %v844 = vand.u32 %v581, 4294901760
      %845 = vmatpush.msra.mxu0 %v844
      %v846 = vand.u32 %v580, 4294901760
      %847 = vmatpush.msra.mxu0 %v846
      %v848 = vand.u32 %v579, 4294901760
      %849 = vmatpush.msra.mxu0 %v848
      %v850 = vand.u32 %v578, 4294901760
      %851 = vmatpush.msra.mxu0 %v850
      %v852 = vand.u32 %v588, 4294901760
      %853 = vmatmul.f32.gmra.mxu0 %v852
      %v854 = vpop.f32.mrf.mxu0
      %v855 = vadd.f32 %v822, %v854
      %v856 = vand.u32 %v591, 4294901760
      %857 = vmatmul.f32.gmra.mxu0 %v856
      %v858 = vpop.f32.mrf.mxu0
      %v859 = vadd.f32 %v826, %v858
      %860 = vdwg.mxu0
      %s861 = scalar_lea.vmem %s1, 64
      %v862 = vld [vmem:[%s861] sm:$0xff]
      %v863 = vld [vmem:[%s861 + $0x8] sm:$0xff]
      %v864 = vld [vmem:[%s861 + $0x10] sm:$0xff]
      %v865 = vld [vmem:[%s861 + $0x18] sm:$0xff]
      %v866 = vld [vmem:[%s861 + $0x20] sm:$0xff]
      %v867 = vld [vmem:[%s861 + $0x28] sm:$0xff]
      %v868 = vld [vmem:[%s861 + $0x30] sm:$0xff]
      %v869 = vld [vmem:[%s861 + $0x38] sm:$0xff]
      %870 = vmatpush.msra.mxu0 0.0
      %871 = vmatpush.msra.mxu0 0.0
      %872 = vmatpush.msra.mxu0 0.0
      %873 = vmatpush.msra.mxu0 0.0
      %874 = vmatpush.msra.mxu0 0.0
      %875 = vmatpush.msra.mxu0 0.0
      %876 = vmatpush.msra.mxu0 0.0
      %877 = vmatpush.msra.mxu0 0.0
      %v878 = vand.u32 %v869, 4294901760
      %879 = vmatpush.msra.mxu0 %v878
      %v880 = vand.u32 %v868, 4294901760
      %881 = vmatpush.msra.mxu0 %v880
      %v882 = vand.u32 %v867, 4294901760
      %883 = vmatpush.msra.mxu0 %v882
      %v884 = vand.u32 %v866, 4294901760
      %885 = vmatpush.msra.mxu0 %v884
      %v886 = vand.u32 %v865, 4294901760
      %887 = vmatpush.msra.mxu0 %v886
      %v888 = vand.u32 %v864, 4294901760
      %889 = vmatpush.msra.mxu0 %v888
      %v890 = vand.u32 %v863, 4294901760
      %891 = vmatpush.msra.mxu0 %v890
      %v892 = vand.u32 %v862, 4294901760
      %893 = vmatpush.msra.mxu0 %v892
      %v894 = vand.u32 %v588, 4294901760
      %v895 = vsub.f32 %v588, %v894
      %v896 = vand.u32 %v895, 4294901760
      %v897 = vsub.f32 %v895, %v896
      %v898 = vand.u32 %v897, 4294901760
      %899 = vmatmul.f32.gmra.mxu0 %v898
      %v900 = vpop.f32.mrf.mxu0
      %v901 = vadd.f32 0.0, %v900
      %v902 = vand.u32 %v591, 4294901760
      %v903 = vsub.f32 %v591, %v902
      %v904 = vand.u32 %v903, 4294901760
      %v905 = vsub.f32 %v903, %v904
      %v906 = vand.u32 %v905, 4294901760
      %907 = vmatmul.f32.gmra.mxu0 %v906
      %v908 = vpop.f32.mrf.mxu0
      %v909 = vadd.f32 0.0, %v908
      %910 = vdwg.mxu0
      %911 = vmatpush.msra.mxu0 0.0
      %912 = vmatpush.msra.mxu0 0.0
      %913 = vmatpush.msra.mxu0 0.0
      %914 = vmatpush.msra.mxu0 0.0
      %915 = vmatpush.msra.mxu0 0.0
      %916 = vmatpush.msra.mxu0 0.0
      %917 = vmatpush.msra.mxu0 0.0
      %918 = vmatpush.msra.mxu0 0.0
      %v919 = vand.u32 %v869, 4294901760
      %v920 = vsub.f32 %v869, %v919
      %v921 = vand.u32 %v920, 4294901760
      %v922 = vsub.f32 %v920, %v921
      %v923 = vand.u32 %v922, 4294901760
      %924 = vmatpush.msra.mxu0 %v923
      %v925 = vand.u32 %v868, 4294901760
      %v926 = vsub.f32 %v868, %v925
      %v927 = vand.u32 %v926, 4294901760
      %v928 = vsub.f32 %v926, %v927
      %v929 = vand.u32 %v928, 4294901760
      %930 = vmatpush.msra.mxu0 %v929
      %v931 = vand.u32 %v867, 4294901760
      %v932 = vsub.f32 %v867, %v931
      %v933 = vand.u32 %v932, 4294901760
      %v934 = vsub.f32 %v932, %v933
      %v935 = vand.u32 %v934, 4294901760
      %936 = vmatpush.msra.mxu0 %v935
      %v937 = vand.u32 %v866, 4294901760
      %v938 = vsub.f32 %v866, %v937
      %v939 = vand.u32 %v938, 4294901760
      %v940 = vsub.f32 %v938, %v939
      %v941 = vand.u32 %v940, 4294901760
      %942 = vmatpush.msra.mxu0 %v941
      %v943 = vand.u32 %v865, 4294901760
      %v944 = vsub.f32 %v865, %v943
      %v945 = vand.u32 %v944, 4294901760
      %v946 = vsub.f32 %v944, %v945
      %v947 = vand.u32 %v946, 4294901760
      %948 = vmatpush.msra.mxu0 %v947
      %v949 = vand.u32 %v864, 4294901760
      %v950 = vsub.f32 %v864, %v949
      %v951 = vand.u32 %v950, 4294901760
      %v952 = vsub.f32 %v950, %v951
      %v953 = vand.u32 %v952, 4294901760
      %954 = vmatpush.msra.mxu0 %v953
      %v955 = vand.u32 %v863, 4294901760
      %v956 = vsub.f32 %v863, %v955
      %v957 = vand.u32 %v956, 4294901760
      %v958 = vsub.f32 %v956, %v957
      %v959 = vand.u32 %v958, 4294901760
      %960 = vmatpush.msra.mxu0 %v959
      %v961 = vand.u32 %v862, 4294901760
      %v962 = vsub.f32 %v862, %v961
      %v963 = vand.u32 %v962, 4294901760
      %v964 = vsub.f32 %v962, %v963
      %v965 = vand.u32 %v964, 4294901760
      %966 = vmatpush.msra.mxu0 %v965
      %v967 = vand.u32 %v588, 4294901760
      %968 = vmatmul.f32.gmra.mxu0 %v967
      %v969 = vpop.f32.mrf.mxu0
      %v970 = vadd.f32 %v901, %v969
      %v971 = vand.u32 %v591, 4294901760
      %972 = vmatmul.f32.gmra.mxu0 %v971
      %v973 = vpop.f32.mrf.mxu0
      %v974 = vadd.f32 %v909, %v973
      %975 = vdwg.mxu0
      %976 = vmatpush.msra.mxu0 0.0
      %977 = vmatpush.msra.mxu0 0.0
      %978 = vmatpush.msra.mxu0 0.0
      %979 = vmatpush.msra.mxu0 0.0
      %980 = vmatpush.msra.mxu0 0.0
      %981 = vmatpush.msra.mxu0 0.0
      %982 = vmatpush.msra.mxu0 0.0
      %983 = vmatpush.msra.mxu0 0.0
      %v984 = vand.u32 %v869, 4294901760
      %v985 = vsub.f32 %v869, %v984
      %986 = vmatpush.msra.mxu0 %v985
      %v987 = vand.u32 %v868, 4294901760
      %v988 = vsub.f32 %v868, %v987
      %989 = vmatpush.msra.mxu0 %v988
      %v990 = vand.u32 %v867, 4294901760
      %v991 = vsub.f32 %v867, %v990
      %992 = vmatpush.msra.mxu0 %v991
      %v993 = vand.u32 %v866, 4294901760
      %v994 = vsub.f32 %v866, %v993
      %995 = vmatpush.msra.mxu0 %v994
      %v996 = vand.u32 %v865, 4294901760
      %v997 = vsub.f32 %v865, %v996
      %998 = vmatpush.msra.mxu0 %v997
      %v999 = vand.u32 %v864, 4294901760
      %v1000 = vsub.f32 %v864, %v999
      %1001 = vmatpush.msra.mxu0 %v1000
      %v1002 = vand.u32 %v863, 4294901760
      %v1003 = vsub.f32 %v863, %v1002
      %1004 = vmatpush.msra.mxu0 %v1003
      %v1005 = vand.u32 %v862, 4294901760
      %v1006 = vsub.f32 %v862, %v1005
      %1007 = vmatpush.msra.mxu0 %v1006
      %v1008 = vand.u32 %v588, 4294901760
      %v1009 = vsub.f32 %v588, %v1008
      %1010 = vmatmul.f32.gmra.mxu0 %v1009
      %v1011 = vpop.f32.mrf.mxu0
      %v1012 = vadd.f32 %v970, %v1011
      %v1013 = vand.u32 %v591, 4294901760
      %v1014 = vsub.f32 %v591, %v1013
      %1015 = vmatmul.f32.gmra.mxu0 %v1014
      %v1016 = vpop.f32.mrf.mxu0
      %v1017 = vadd.f32 %v974, %v1016
      %1018 = vdwg.mxu0
      %1019 = vmatpush.msra.mxu0 0.0
      %1020 = vmatpush.msra.mxu0 0.0
      %1021 = vmatpush.msra.mxu0 0.0
      %1022 = vmatpush.msra.mxu0 0.0
      %1023 = vmatpush.msra.mxu0 0.0
      %1024 = vmatpush.msra.mxu0 0.0
      %1025 = vmatpush.msra.mxu0 0.0
      %1026 = vmatpush.msra.mxu0 0.0
      %v1027 = vand.u32 %v869, 4294901760
      %1028 = vmatpush.msra.mxu0 %v1027
      %v1029 = vand.u32 %v868, 4294901760
      %1030 = vmatpush.msra.mxu0 %v1029
      %v1031 = vand.u32 %v867, 4294901760
      %1032 = vmatpush.msra.mxu0 %v1031
      %v1033 = vand.u32 %v866, 4294901760
      %1034 = vmatpush.msra.mxu0 %v1033
      %v1035 = vand.u32 %v865, 4294901760
      %1036 = vmatpush.msra.mxu0 %v1035
      %v1037 = vand.u32 %v864, 4294901760
      %1038 = vmatpush.msra.mxu0 %v1037
      %v1039 = vand.u32 %v863, 4294901760
      %1040 = vmatpush.msra.mxu0 %v1039
      %v1041 = vand.u32 %v862, 4294901760
      %1042 = vmatpush.msra.mxu0 %v1041
      %v1043 = vand.u32 %v588, 4294901760
      %v1044 = vsub.f32 %v588, %v1043
      %v1045 = vand.u32 %v1044, 4294901760
      %1046 = vmatmul.f32.gmra.mxu0 %v1045
      %v1047 = vpop.f32.mrf.mxu0
      %v1048 = vadd.f32 %v1012, %v1047
      %v1049 = vand.u32 %v591, 4294901760
      %v1050 = vsub.f32 %v591, %v1049
      %v1051 = vand.u32 %v1050, 4294901760
      %1052 = vmatmul.f32.gmra.mxu0 %v1051
      %v1053 = vpop.f32.mrf.mxu0
      %v1054 = vadd.f32 %v1017, %v1053
      %1055 = vdwg.mxu0
      %1056 = vmatpush.msra.mxu0 0.0
      %1057 = vmatpush.msra.mxu0 0.0
      %1058 = vmatpush.msra.mxu0 0.0
      %1059 = vmatpush.msra.mxu0 0.0
      %1060 = vmatpush.msra.mxu0 0.0
      %1061 = vmatpush.msra.mxu0 0.0
      %1062 = vmatpush.msra.mxu0 0.0
      %1063 = vmatpush.msra.mxu0 0.0
      %v1064 = vand.u32 %v869, 4294901760
      %v1065 = vsub.f32 %v869, %v1064
      %v1066 = vand.u32 %v1065, 4294901760
      %1067 = vmatpush.msra.mxu0 %v1066
      %v1068 = vand.u32 %v868, 4294901760
      %v1069 = vsub.f32 %v868, %v1068
      %v1070 = vand.u32 %v1069, 4294901760
      %1071 = vmatpush.msra.mxu0 %v1070
      %v1072 = vand.u32 %v867, 4294901760
      %v1073 = vsub.f32 %v867, %v1072
      %v1074 = vand.u32 %v1073, 4294901760
      %1075 = vmatpush.msra.mxu0 %v1074
      %v1076 = vand.u32 %v866, 4294901760
      %v1077 = vsub.f32 %v866, %v1076
      %v1078 = vand.u32 %v1077, 4294901760
      %1079 = vmatpush.msra.mxu0 %v1078
      %v1080 = vand.u32 %v865, 4294901760
      %v1081 = vsub.f32 %v865, %v1080
      %v1082 = vand.u32 %v1081, 4294901760
      %1083 = vmatpush.msra.mxu0 %v1082
      %v1084 = vand.u32 %v864, 4294901760
      %v1085 = vsub.f32 %v864, %v1084
      %v1086 = vand.u32 %v1085, 4294901760
      %1087 = vmatpush.msra.mxu0 %v1086
      %v1088 = vand.u32 %v863, 4294901760
      %v1089 = vsub.f32 %v863, %v1088
      %v1090 = vand.u32 %v1089, 4294901760
      %1091 = vmatpush.msra.mxu0 %v1090
      %v1092 = vand.u32 %v862, 4294901760
      %v1093 = vsub.f32 %v862, %v1092
      %v1094 = vand.u32 %v1093, 4294901760
      %1095 = vmatpush.msra.mxu0 %v1094
      %v1096 = vand.u32 %v588, 4294901760
      %1097 = vmatmul.f32.gmra.mxu0 %v1096
      %v1098 = vpop.f32.mrf.mxu0
      %v1099 = vadd.f32 %v1048, %v1098
      %v1100 = vand.u32 %v591, 4294901760
      %1101 = vmatmul.f32.gmra.mxu0 %v1100
      %v1102 = vpop.f32.mrf.mxu0
      %v1103 = vadd.f32 %v1054, %v1102
      %1104 = vdwg.mxu0
      %1105 = vmatpush.msra.mxu0 0.0
      %1106 = vmatpush.msra.mxu0 0.0
      %1107 = vmatpush.msra.mxu0 0.0
      %1108 = vmatpush.msra.mxu0 0.0
      %1109 = vmatpush.msra.mxu0 0.0
      %1110 = vmatpush.msra.mxu0 0.0
      %1111 = vmatpush.msra.mxu0 0.0
      %1112 = vmatpush.msra.mxu0 0.0
      %v1113 = vand.u32 %v869, 4294901760
      %1114 = vmatpush.msra.mxu0 %v1113
      %v1115 = vand.u32 %v868, 4294901760
      %1116 = vmatpush.msra.mxu0 %v1115
      %v1117 = vand.u32 %v867, 4294901760
      %1118 = vmatpush.msra.mxu0 %v1117
      %v1119 = vand.u32 %v866, 4294901760
      %1120 = vmatpush.msra.mxu0 %v1119
      %v1121 = vand.u32 %v865, 4294901760
      %1122 = vmatpush.msra.mxu0 %v1121
      %v1123 = vand.u32 %v864, 4294901760
      %1124 = vmatpush.msra.mxu0 %v1123
      %v1125 = vand.u32 %v863, 4294901760
      %1126 = vmatpush.msra.mxu0 %v1125
      %v1127 = vand.u32 %v862, 4294901760
      %1128 = vmatpush.msra.mxu0 %v1127
      %v1129 = vand.u32 %v588, 4294901760
      %1130 = vmatmul.f32.gmra.mxu0 %v1129
      %v1131 = vpop.f32.mrf.mxu0
      %v1132 = vadd.f32 %v1099, %v1131
      %v1133 = vand.u32 %v591, 4294901760
      %1134 = vmatmul.f32.gmra.mxu0 %v1133
      %v1135 = vpop.f32.mrf.mxu0
      %v1136 = vadd.f32 %v1103, %v1135
      %1137 = vdwg.mxu0
      %v1138 = vmax.f32 %v855, %v1132
      %v1139 = vmax.f32 %v859, %v1136
      %vm1140 = vcmask 293888
      %1141 = vst.msk [vmem:[%s143] sm:$0xff] %vm1140, %v1138
      %vm1142 = vcmask 286720
      %1143 = vst.msk [vmem:[%s143 + $0x8] sm:$0x1] %vm1142, %v1139
      %p1144 = scmp.lt.s32.totalorder %s13, 1
      %s1145 = scalar_select %p1144, %s13, 1
      %s1146 = smul.addr %s1145, 2
      %s1147 = smul.addr %s1146, 8
      %s1148 = scalar_lea.vmem %s2, %s1147
      // Predicated region
      $region29: #{pooling_layer.1} parent=27 // pred_check
        %p1149 = pneg %p78
      $region30: #{pooling_layer.1} parent=27 // pred_check_branch
        %1151 = sbr.rel (%p1149) target = $region32
      $region31: #{pooling_layer.1} parent=27 // pred_region
        _
      $region32: #{pooling_layer.1} parent=27 // pred_fallthru
        _
    $region28: #{pooling_layer.1} parent=5 // pred_fallthru
      _
    %p1152 = scmp.le.s32.totalorder 2, %s8
    // Predicated region
    $region33: #{pooling_layer.1} parent=5 // pred_check
      %p1153 = pneg %p1152
    $region34: #{pooling_layer.1} parent=5 // pred_check_branch
      %1155 = sbr.rel (%p1153) target = $region36
    $region35: #{pooling_layer.1} parent=5 // pred_region
      %s1156 = ssub.s32 %s8, 2
      // Predicated region
      $region37: #{pooling_layer.1} parent=35 // pred_check
        %p1157 = pneg %p84
      $region38: #{pooling_layer.1} parent=35 // pred_check_branch
        %1159 = sbr.rel (%p1157) target = $region40
      $region39: #{pooling_layer.1} parent=35 // pred_region
        %p1160 = scmp.lt.s32.totalorder %s14, 1
        %s1161 = scalar_select %p1160, %s14, 1
        %s1162 = smul.addr %s1161, 2
        %s1163 = smul.addr %s1162, 8
        %s1164 = scalar_lea.vmem %s2, %s1163
      $region40: #{pooling_layer.1} parent=35 // pred_fallthru
        _
    $region36: #{pooling_layer.1} parent=5 // pred_fallthru
      _
  $region6: #{pooling_layer.1} parent=0 // loop_footer
    %s12 = sadd.s32 1, %s8
  $region7: #{pooling_layer.1} parent=0 // loop_footer_branch
    %7 = sbr.rel target = $region3
  $region8: #{pooling_layer.1} parent=0 // loop_exit
    _

</llo_original>
